<compile_context>
chip_gen: v7x
topology: tpu7x:2x2x1
jax: 0.10.0
libtpu: 0.0.40
codegen_flags: <defaults>
</compile_context>

<pallas_src>
import math

import jax
import jax.numpy as jnp
from jax.experimental import pallas as pl
from jax.experimental.pallas import tpu as pltpu

_LANE = 128
_TARGET_BLOCK_BYTES = 4 * 1024 * 1024


def _from_int_to_list(p):
    if isinstance(p, int):
        return [p, p]
    return list(p)


def _expanded_weight(w, n_bins):
    """Fold conv-over-H + mean-over-H into per-input-row weights.

    w: (ch, cin, kh, kw) -> We: (ch, cin, n_bins, kw) with
    We[c, ci, r, dw] = (1/h_out) * sum_{dh valid for row r} w[c, ci, dh, dw].
    (Sums small weights instead of large activations -> well conditioned.)
    """
    ch, cin, kh, kw = w.shape
    h_out = n_bins - kh + 1
    rows = []
    for r in range(n_bins):
        dh_lo = max(0, r - h_out + 1)
        dh_hi = min(kh - 1, r)
        rows.append(w[:, :, dh_lo:dh_hi + 1, :].sum(axis=2))
    return jnp.stack(rows, axis=2) / float(h_out)


def _make_kernel(branch_rows, max_l, max_r, t_out, k_dim, has_halo):
    """branch_rows: list of (row_base, csurv, lo, hi, kw, left)."""
    whalo = max_l + max_r

    def kernel(*refs):
        if has_halo:
            x_ref, h_ref, w_ref, b_ref, o_ref = refs
        else:
            x_ref, w_ref, b_ref, o_ref = refs

        wx = x_ref.shape[-1]
        xb = x_ref[0].reshape(k_dim, wx)                 # (Cin*n_bins, wx), free
        # One fused MXU matmul for all branches (mean-over-H folded in weights).
        gb = jnp.dot(w_ref[...], xb, preferred_element_type=jnp.float32)

        if has_halo:
            xh = h_ref[0].reshape(k_dim, whalo)
            gh = jnp.dot(w_ref[...], xh, preferred_element_type=jnp.float32)
            pieces = []
            if max_l > 0:
                pieces.append(gh[:, :max_l])
            pieces.append(gb)
            if max_r > 0:
                pieces.append(gh[:, max_l:])
            g = jnp.concatenate(pieces, axis=1) if len(pieces) > 1 else gb
        else:
            g = gb                                       # x block already has halo

        bias = b_ref[...]                                # (maxch, 1)
        # Column j of g corresponds to global time t0 + j - max_l.
        for (rbase, cs, lo, hi, kw, left) in branch_rows:
            acc = None
            for dw in range(kw):
                r0 = rbase + dw * cs
                c0 = max_l - left + dw
                sl = g[r0:r0 + cs, c0:c0 + t_out]
                acc = sl if acc is None else acc + sl
            o_ref[0, lo:hi, :] = (acc + bias[lo:hi, :]).astype(o_ref.dtype)

    return kernel


def parallel_timbre_mean_conv2d(x, params, kernels_list, channels_list,
                                pad_value=0.0, time_block_cols=None):
    """Fused Pallas forward of ParallelTimbre_Mean_Conv2d.

    x: (B, Cin, n_bins, n_t).  params[i] = (weight (ch, Cin, kh, kw), bias (ch,)
    or (ch, 1)).  Returns (B, sum(channels_list), 1, n_t).
    """
    x = x.astype(jnp.float32)
    B, cin, n_bins, n_t = x.shape
    out_dim = sum(channels_list)
    maxch = max(channels_list)
    k_dim = cin * n_bins

    kks = [_from_int_to_list(k) for k in kernels_list]
    lefts = [kw // 2 for _, kw in kks]
    rights = [kw - kw // 2 - 1 for _, kw in kks]
    max_l, max_r = max(lefts), max(rights)
    whalo = max_l + max_r

    # Surviving (last-writer) channel ranges per branch — reproduces the
    # reference, where every branch writes channels [0, ch_i).
    live = []
    for i, ((kh, kw), ch) in enumerate(zip(kks, channels_list)):
        lo = max(channels_list[i + 1:], default=0)
        if ch > lo:
            live.append((i, kh, kw, lo, ch))

    # Fused block weight (M, Cin*n_bins) + bias (maxch, 1); 1/h_out folded in.
    w_rows, branch_rows = [], []
    bias = jnp.zeros((maxch, 1), jnp.float32)
    rbase = 0
    for (i, kh, kw, lo, hi) in live:
        w_full, b_full = params[i]
        we = _expanded_weight(w_full.astype(jnp.float32), n_bins)[lo:hi]
        cs = hi - lo
        for dw in range(kw):
            w_rows.append(we[:, :, :, dw].reshape(cs, k_dim))
        bias = bias.at[lo:hi, 0].set(
            b_full.astype(jnp.float32).reshape(-1)[lo:hi])
        branch_rows.append((rbase, cs, lo, hi, kw, kw // 2))
        rbase += cs * kw
    w_all = jnp.concatenate(w_rows, axis=0)               # (M, Cin*n_bins)
    m_rows = w_all.shape[0]

    # ---- time tiling: size blocks by bytes, 128-multiple lanes ----
    bytes_per_col = k_dim * 4
    if time_block_cols is None:
        tile_t = max(_LANE, (_TARGET_BLOCK_BYTES // bytes_per_col) // _LANE * _LANE)
    else:
        tile_t = max(_LANE, int(time_block_cols) // _LANE * _LANE)
    k_full = n_t // tile_t
    # keep >= 2 parallel grid steps so both TensorCores get work (v7x)
    while k_full >= 1 and B * k_full < 2 and tile_t > _LANE:
        tile_t = max(_LANE, (tile_t // 2) // _LANE * _LANE)
        k_full = n_t // tile_t
    rem = n_t - k_full * tile_t

    # ---- VMEM budget derived from actual block sizes (v7x has 64 MiB/TC) ----
    blk_in = bytes_per_col * tile_t
    blk_out = maxch * tile_t * 4
    blk_halo = k_dim * max(whalo, 1) * 4
    g_bytes = m_rows * (tile_t + whalo) * 4
    est = 2 * (blk_in + blk_out + blk_halo) + w_all.size * 4 + 4 * g_bytes + (1 << 20)
    vmem_limit = int(min(max(2 * est, 16 * 1024 * 1024), 40 * 1024 * 1024))

    outs = []

    # ---- main call: k_full full, in-bounds, lane-dense tiles ----
    if k_full > 0:
        inputs = [x]
        in_specs = [pl.BlockSpec((1, cin, n_bins, tile_t),
                                 lambda b, t: (b, 0, 0, t))]
        has_halo = whalo > 0
        if has_halo:
            offs = jnp.array([o - max_l for o in range(max_l)] +
                             [tile_t + o for o in range(max_r)], jnp.int32)
            base = (jnp.arange(k_full, dtype=jnp.int32) * tile_t)[:, None]
            col_ids = (base + offs[None, :]).reshape(-1)
            valid = (col_ids >= 0) & (col_ids < n_t)
            gathered = jnp.take(x, jnp.clip(col_ids, 0, n_t - 1), axis=3)
            halo = jnp.where(valid[None, None, None, :], gathered, pad_value)
            halo = (halo.reshape(B, cin, n_bins, k_full, whalo)
                    .transpose(0, 3, 1, 2, 4)
                    .reshape(B * k_full, cin, n_bins, whalo))
            inputs.append(halo)
            in_specs.append(pl.BlockSpec(
                (1, cin, n_bins, whalo),
                lambda b, t: (b * k_full + t, 0, 0, 0)))
        inputs += [w_all, bias]
        in_specs += [pl.BlockSpec(w_all.shape, lambda b, t: (0, 0)),
                     pl.BlockSpec(bias.shape, lambda b, t: (0, 0))]

        kern = _make_kernel(branch_rows, max_l, max_r, tile_t, k_dim, has_halo)
        y_main = pl.pallas_call(
            kern,
            out_shape=jax.ShapeDtypeStruct((B, maxch, k_full * tile_t),
                                           jnp.float32),
            grid=(B, k_full),
            in_specs=in_specs,
            out_specs=pl.BlockSpec((1, maxch, tile_t), lambda b, t: (b, 0, t)),
            compiler_params=pltpu.CompilerParams(
                dimension_semantics=("parallel", "parallel"),
                vmem_limit_bytes=vmem_limit),
        )(*inputs)
        outs.append(y_main)

    # ---- tail call: remaining columns (or whole input when it is small) ----
    if rem > 0 or k_full == 0:
        t0 = k_full * tile_t
        rem_w = n_t - t0
        xt_w = max_l + rem_w + max_r
        col_ids = jnp.arange(xt_w, dtype=jnp.int32) + (t0 - max_l)
        valid = (col_ids >= 0) & (col_ids < n_t)
        xt = jnp.take(x, jnp.clip(col_ids, 0, n_t - 1), axis=3)
        xt = jnp.where(valid[None, None, None, :], xt, pad_value)

        kern = _make_kernel(branch_rows, max_l, max_r, rem_w, k_dim, False)
        y_tail = pl.pallas_call(
            kern,
            out_shape=jax.ShapeDtypeStruct((B, maxch, rem_w), jnp.float32),
            grid=(B,),
            in_specs=[pl.BlockSpec((1, cin, n_bins, xt_w),
                                   lambda b: (b, 0, 0, 0)),
                      pl.BlockSpec(w_all.shape, lambda b: (0, 0)),
                      pl.BlockSpec(bias.shape, lambda b: (0, 0))],
            out_specs=pl.BlockSpec((1, maxch, rem_w), lambda b: (b, 0, 0)),
            compiler_params=pltpu.CompilerParams(
                dimension_semantics=("parallel",),
                vmem_limit_bytes=vmem_limit),
        )(xt, w_all, bias)
        outs.append(y_tail)

    y_top = outs[0] if len(outs) == 1 else jnp.concatenate(outs, axis=2)
    if out_dim > maxch:
        zeros = jnp.zeros((B, out_dim - maxch, n_t), jnp.float32)
        y_full = jnp.concatenate([y_top, zeros], axis=1)
    else:
        y_full = y_top
    return y_full[:, :, None, :]                          # (B, out_dim, 1, n_t)


def _reference_jax(x, params, kernels_list, channels_list, pad_value=0.0):
    """Pure-JAX reference mirroring the PyTorch module."""
    B, Cin, n_bins, n_t = x.shape
    out_dim = sum(channels_list)
    y = jnp.zeros((B, out_dim, 1, n_t), jnp.float32)
    for i, (ks, ch) in enumerate(zip(kernels_list, channels_list)):
        kh, kw = _from_int_to_list(ks)
        left = kw // 2
        right = kw - kw // 2 - 1
        xp = jnp.pad(x, ((0, 0), (0, 0), (0, 0), (left, right)),
                     constant_values=pad_value)
        w, b = params[i]
        conv = jax.lax.conv_general_dilated(
            xp, w, window_strides=(1, 1), padding="VALID",
            dimension_numbers=("NCHW", "OIHW", "NCHW"))
        conv = conv + b.reshape(1, -1, 1, 1)
        branch = conv.mean(axis=2)                        # (B, ch, n_t)
        y = y.at[:, 0:ch, :, :].set(branch[:, :, None, :])
    return y


if __name__ == "__main__":
    kernels_list = [[3, 3], [5, 5], 7]                    # int exercises fromIntToList
    channels_list = [6, 4, 3]
    B, Cin, n_bins = 2, 4, 16

    key = jax.random.PRNGKey(0)
    params = []
    for ks, ch in zip(kernels_list, channels_list):
        kh, kw = _from_int_to_list(ks)
        kw_key, kb_key, key = jax.random.split(key, 3)
        fan_in = Cin * kh * kw
        scale = 1.0 / math.sqrt(fan_in)
        w = jax.random.uniform(kw_key, (ch, Cin, kh, kw), jnp.float32,
                               minval=-scale, maxval=scale)
        b = jax.random.uniform(kb_key, (ch, 1), jnp.float32,
                               minval=-scale, maxval=scale)
        params.append((w, b))

    # 1) module-sized shape (single-block / tail path)
    kx, key = jax.random.split(key)
    x = jax.random.normal(kx, (B, Cin, n_bins, 16), dtype=jnp.float32)
    y = jax.block_until_ready(
        parallel_timbre_mean_conv2d(x, params, kernels_list, channels_list))
    y_ref = jax.block_until_ready(
        _reference_jax(x, params, kernels_list, channels_list))
    assert y.shape == (B, sum(channels_list), 1, 16)
    err = float(jnp.max(jnp.abs(y - y_ref)))
    assert err < 1e-3, err

    # 2) longer sequence with a small forced time block: exercises the tiled
    #    main path (halo gather) + tail path + 128-multiple lane-dense tiles.
    kx, key = jax.random.split(key)
    x2 = jax.random.normal(kx, (B, Cin, n_bins, 300), dtype=jnp.float32)
    y2 = jax.block_until_ready(
        parallel_timbre_mean_conv2d(x2, params, kernels_list, channels_list,
                                    time_block_cols=128))
    y2_ref = jax.block_until_ready(
        _reference_jax(x2, params, kernels_list, channels_list))
    err2 = float(jnp.max(jnp.abs(y2 - y2_ref)))
    assert err2 < 1e-3, err2

    print("KERNEL_OK")
</pallas_src>

<mosaic_0001>
module attributes {stable_mosaic.version = 11 : i64} {
  func.func @kernel(%arg0: i32, %arg1: memref<1x4x16x22xf32, #tpu.memory_space<vmem>>, %arg2: memref<32x64xf32, #tpu.memory_space<vmem>>, %arg3: memref<6x1xf32, #tpu.memory_space<vmem>>, %arg4: memref<1x6x16xf32, #tpu.memory_space<vmem>>) attributes {dimension_semantics = [#tpu.dimension_semantics<parallel>], iteration_bounds = array<i64: 2>, scalar_prefetch = 0 : i64, scratch_operands = 0 : i64, tpu.core_type = #tpu.core_type<tc>, window_params = [{transform_indices = @transform_0, window_bounds = array<i64: 1, 4, 16, 22>}, {pipeline_mode = #tpu.pipeline_mode<synchronous>, transform_indices = @transform_1, window_bounds = array<i64: 32, 64>}, {pipeline_mode = #tpu.pipeline_mode<synchronous>, transform_indices = @transform_2, window_bounds = array<i64: 6, 1>}, {transform_indices = @transform_3, window_bounds = array<i64: 1, 6, 16>}]} {
    %c0 = arith.constant 0 : index
    %c0_0 = arith.constant 0 : index
    %c0_1 = arith.constant 0 : index
    %c0_2 = arith.constant 0 : index
    %0 = vector.load %arg1[%c0, %c0_0, %c0_1, %c0_2] : memref<1x4x16x22xf32, #tpu.memory_space<vmem>>, vector<1x4x16x22xf32>
    %1 = vector.shape_cast %0 : vector<1x4x16x22xf32> to vector<4x16x22xf32>
    %2 = vector.shape_cast %1 : vector<4x16x22xf32> to vector<64x22xf32>
    %c0_3 = arith.constant 0 : index
    %c0_4 = arith.constant 0 : index
    %3 = vector.load %arg2[%c0_3, %c0_4] : memref<32x64xf32, #tpu.memory_space<vmem>>, vector<32x64xf32>
    %cst = arith.constant dense<0.000000e+00> : vector<32x22xf32>
    %4 = tpu.matmul %3, %2, %cst {dimension_numbers = #tpu.dot_dimension_numbers<[1], [0], [0], [1], [0, 0, 1, 1], [], []>} : vector<32x64xf32>, vector<64x22xf32>, vector<32x22xf32> -> vector<32x22xf32>
    %c0_5 = arith.constant 0 : index
    %c0_6 = arith.constant 0 : index
    %5 = vector.load %arg3[%c0_5, %c0_6] : memref<6x1xf32, #tpu.memory_space<vmem>>, vector<6x1xf32>
    %6 = vector.extract_strided_slice %4 {offsets = [0, 2], sizes = [2, 16], strides = [1, 1]} : vector<32x22xf32> to vector<2x16xf32>
    %7 = vector.extract_strided_slice %4 {offsets = [2, 3], sizes = [2, 16], strides = [1, 1]} : vector<32x22xf32> to vector<2x16xf32>
    %8 = arith.addf %6, %7 : vector<2x16xf32>
    %9 = vector.extract_strided_slice %4 {offsets = [4, 4], sizes = [2, 16], strides = [1, 1]} : vector<32x22xf32> to vector<2x16xf32>
    %10 = arith.addf %8, %9 : vector<2x16xf32>
    %11 = vector.extract_strided_slice %5 {offsets = [4, 0], sizes = [2, 1], strides = [1, 1]} : vector<6x1xf32> to vector<2x1xf32>
    %12 = vector.broadcast %11 : vector<2x1xf32> to vector<2x16xf32>
    %13 = arith.addf %10, %12 : vector<2x16xf32>
    %c0_7 = arith.constant 0 : index
    %c4 = arith.constant 4 : index
    %c0_8 = arith.constant 0 : index
    %14 = vector.load %arg4[%c0_7, %c4, %c0_8] : memref<1x6x16xf32, #tpu.memory_space<vmem>>, vector<1x2x16xf32>
    %15 = vector.shape_cast %14 : vector<1x2x16xf32> to vector<2x16xf32>
    %16 = vector.shape_cast %13 : vector<2x16xf32> to vector<1x2x16xf32>
    tpu.vector_store %arg4[%c0_7, %c4, %c0_8], %16 {strides = array<i32>} : memref<1x6x16xf32, #tpu.memory_space<vmem>>, vector<1x2x16xf32>,
    %17 = vector.extract_strided_slice %4 {offsets = [6, 1], sizes = [1, 16], strides = [1, 1]} : vector<32x22xf32> to vector<1x16xf32>
    %18 = vector.extract_strided_slice %4 {offsets = [7, 2], sizes = [1, 16], strides = [1, 1]} : vector<32x22xf32> to vector<1x16xf32>
    %19 = arith.addf %17, %18 : vector<1x16xf32>
    %20 = vector.extract_strided_slice %4 {offsets = [8, 3], sizes = [1, 16], strides = [1, 1]} : vector<32x22xf32> to vector<1x16xf32>
    %21 = arith.addf %19, %20 : vector<1x16xf32>
    %22 = vector.extract_strided_slice %4 {offsets = [9, 4], sizes = [1, 16], strides = [1, 1]} : vector<32x22xf32> to vector<1x16xf32>
    %23 = arith.addf %21, %22 : vector<1x16xf32>
    %24 = vector.extract_strided_slice %4 {offsets = [10, 5], sizes = [1, 16], strides = [1, 1]} : vector<32x22xf32> to vector<1x16xf32>
    %25 = arith.addf %23, %24 : vector<1x16xf32>
    %26 = vector.extract_strided_slice %5 {offsets = [3, 0], sizes = [1, 1], strides = [1, 1]} : vector<6x1xf32> to vector<1x1xf32>
    %27 = vector.broadcast %26 : vector<1x1xf32> to vector<1x16xf32>
    %28 = arith.addf %25, %27 : vector<1x16xf32>
    %c0_9 = arith.constant 0 : index
    %c3 = arith.constant 3 : index
    %c0_10 = arith.constant 0 : index
    %29 = vector.load %arg4[%c0_9, %c3, %c0_10] : memref<1x6x16xf32, #tpu.memory_space<vmem>>, vector<1x1x16xf32>
    %30 = vector.shape_cast %29 : vector<1x1x16xf32> to vector<1x16xf32>
    %31 = vector.shape_cast %28 : vector<1x16xf32> to vector<1x1x16xf32>
    tpu.vector_store %arg4[%c0_9, %c3, %c0_10], %31 {strides = array<i32>} : memref<1x6x16xf32, #tpu.memory_space<vmem>>, vector<1x1x16xf32>,
    %32 = vector.extract_strided_slice %4 {offsets = [11, 0], sizes = [3, 16], strides = [1, 1]} : vector<32x22xf32> to vector<3x16xf32>
    %33 = vector.extract_strided_slice %4 {offsets = [14, 1], sizes = [3, 16], strides = [1, 1]} : vector<32x22xf32> to vector<3x16xf32>
    %34 = arith.addf %32, %33 : vector<3x16xf32>
    %35 = vector.extract_strided_slice %4 {offsets = [17, 2], sizes = [3, 16], strides = [1, 1]} : vector<32x22xf32> to vector<3x16xf32>
    %36 = arith.addf %34, %35 : vector<3x16xf32>
    %37 = vector.extract_strided_slice %4 {offsets = [20, 3], sizes = [3, 16], strides = [1, 1]} : vector<32x22xf32> to vector<3x16xf32>
    %38 = arith.addf %36, %37 : vector<3x16xf32>
    %39 = vector.extract_strided_slice %4 {offsets = [23, 4], sizes = [3, 16], strides = [1, 1]} : vector<32x22xf32> to vector<3x16xf32>
    %40 = arith.addf %38, %39 : vector<3x16xf32>
    %41 = vector.extract_strided_slice %4 {offsets = [26, 5], sizes = [3, 16], strides = [1, 1]} : vector<32x22xf32> to vector<3x16xf32>
    %42 = arith.addf %40, %41 : vector<3x16xf32>
    %43 = vector.extract_strided_slice %4 {offsets = [29, 6], sizes = [3, 16], strides = [1, 1]} : vector<32x22xf32> to vector<3x16xf32>
    %44 = arith.addf %42, %43 : vector<3x16xf32>
    %45 = vector.extract_strided_slice %5 {offsets = [0, 0], sizes = [3, 1], strides = [1, 1]} : vector<6x1xf32> to vector<3x1xf32>
    %46 = vector.broadcast %45 : vector<3x1xf32> to vector<3x16xf32>
    %47 = arith.addf %44, %46 : vector<3x16xf32>
    %c0_11 = arith.constant 0 : index
    %c0_12 = arith.constant 0 : index
    %c0_13 = arith.constant 0 : index
    %48 = vector.load %arg4[%c0_11, %c0_12, %c0_13] : memref<1x6x16xf32, #tpu.memory_space<vmem>>, vector<1x3x16xf32>
    %49 = vector.shape_cast %48 : vector<1x3x16xf32> to vector<3x16xf32>
    %50 = vector.shape_cast %47 : vector<3x16xf32> to vector<1x3x16xf32>
    tpu.vector_store %arg4[%c0_11, %c0_12, %c0_13], %50 {strides = array<i32>} : memref<1x6x16xf32, #tpu.memory_space<vmem>>, vector<1x3x16xf32>,
    return
  }
  func.func @transform_0(%arg0: i32) -> (i32, i32, i32, i32) {
    %c0_i32 = arith.constant 0 : i32
    %c0_i32_0 = arith.constant 0 : i32
    %c0_i32_1 = arith.constant 0 : i32
    %c0_i32_2 = arith.constant 0 : i32
    return %arg0, %c0_i32, %c0_i32_0, %c0_i32_1 : i32, i32, i32, i32
  }
  func.func @transform_1(%arg0: i32) -> (i32, i32) {
    %c0_i32 = arith.constant 0 : i32
    %c0_i32_0 = arith.constant 0 : i32
    %c0_i32_1 = arith.constant 0 : i32
    return %c0_i32, %c0_i32_0 : i32, i32
  }
  func.func @transform_2(%arg0: i32) -> (i32, i32) {
    %c0_i32 = arith.constant 0 : i32
    %c0_i32_0 = arith.constant 0 : i32
    %c0_i32_1 = arith.constant 0 : i32
    return %c0_i32, %c0_i32_0 : i32, i32
  }
  func.func @transform_3(%arg0: i32) -> (i32, i32, i32) {
    %c0_i32 = arith.constant 0 : i32
    %c0_i32_0 = arith.constant 0 : i32
    %c0_i32_1 = arith.constant 0 : i32
    return %arg0, %c0_i32, %c0_i32_0 : i32, i32, i32
  }
}

</mosaic_0001>

<llo_original>
// kernel: tpu_custom_call.1
$region0: #{tpu_custom_call.1}
  #allocation0 [shape = 'u32[]', space=smem, size = 0x4, offset = 0x4, fixed_abs, tag = 'smem constant byte address 0x4 - core index']
  #allocation1 [shape = 'u32[144,128]{1,0:T(1,128)}', space=vmem, size = 0x12000, scoped, tag = 'internal scratch']
  %s0 = inlined_call_operand.hbm [shape: f32[2,4,16,22], index: 0, kind: input, shape index: {}]
  %s1 = inlined_call_operand.hbm [shape: f32[32,64], index: 1, kind: input, shape index: {}]
  %s2 = inlined_call_operand.vmem [shape: f32[6,1], index: 2, kind: input, shape index: {}]
  %s3 = inlined_call_operand.vmem [shape: f32[2,6,16], index: 3, kind: output, shape index: {}]
  %s4 = sld [smem:[#allocation0]]
  $region53: #{tpu_custom_call.1} parent=0
    _
  %s6 = ssub.s32 1, %s4
  %s7 = scalar_select 0, %s6, %s4
  $region1: #{tpu_custom_call.1} parent=0
    #allocation2 [shape = 'u8[65536]{0}', space=vmem, size = 0x10000, scoped, tag = 'input window, operand 0']
    #allocation3 [shape = 's32[2]{0}', space=sflag, size = 0x8, scoped, tag = 'scoped memory for tpu_custom_call.1']
    #allocation4 [shape = 'u8[16384]{0}', space=vmem, size = 0x4000, scoped, tag = 'input window, operand 1, single buffered']
    #allocation5 [shape = 's32[1]{0}', space=sflag, size = 0x4, scoped, tag = 'scoped memory for tpu_custom_call.1']
    %8 = vsyncpa [#allocation3], 0
    %s9 = scalar_lea.sflag [#allocation3], 1
    %10 = vsyncpa %s9, 0
    %11 = vsyncpa [#allocation5], 0
    loop: start=0, step=1, limit=4
    $region2: #{tpu_custom_call.1} parent=1 // loop_pre_header
      _
    $region3: #{tpu_custom_call.1} parent=1 // loop_header
      %s13 = sphi 0, %s17
      %p14 = scmp.ge.s32.totalorder %s13, 4
      %s23 = sphi 0, %s25
      %s26 = sphi 0, %s23
      %s27 = sphi 0, %s26
      %s43 = sphi 0, %s27
      %s47 = sphi 0, %s47
      %s49 = sphi 0, %s47
      %s50 = sphi 0, %s49
      %s64 = sphi 0, %s50
      %s68 = sphi 0, %s68
      %s70 = sphi 0, %s68
      %s71 = sphi 0, %s70
      %s85 = sphi 0, %s71
      %s91 = sphi 0, %s93
      %s94 = sphi 0, %s91
      %s95 = sphi 0, %s94
      %s111 = sphi 0, %s95
    $region4: #{tpu_custom_call.1} parent=1 // loop_header_branch
      %16 = sbr.rel (%p14) target = $region8
    $region5: #{tpu_custom_call.1} parent=1 // loop_body
      %s18 = ssub.s32 %s13, 1
      %s19 = ssub.s32 %s13, 2
      %s20 = sadd.s32 %s13, 1
      %s21 = ssub.s32 %s13, %s20
      %p22 = scmp.eq.s32.totalorder %s21, 0
      %s24 = sadd.s32 %s23, 1
      %s25 = scalar_select %p22, %s23, %s24
      %p28 = pneg %p22
      %p29 = scmp.eq.s32.totalorder %s13, 1
      %p30 = por %p28, %p29
      %p31 = scmp.ne.s32.totalorder %s23, %s26
      %p32 = scmp.eq.s32.totalorder %s13, 0
      %p33 = por %p31, %p32
      %p34 = scmp.ne.s32.totalorder %s23, %s26
      %p35 = scmp.eq.s32.totalorder %s18, 1
      %p36 = por %p34, %p35
      %p37 = scmp.ne.s32.totalorder %s26, %s27
      %p38 = scmp.eq.s32.totalorder %s18, 0
      %p39 = por %p37, %p38
      %p40 = scmp.ne.s32.totalorder %s26, %s27
      %p41 = scmp.eq.s32.totalorder %s19, 1
      %p42 = por %p40, %p41
      %p44 = scmp.ne.s32.totalorder %s27, %s43
      %p45 = scmp.eq.s32.totalorder %s19, 0
      %p46 = por %p44, %p45
      %s48 = sadd.s32 %s47, 1
      %p51 = scmp.eq.s32.totalorder %s13, 1
      %p52 = scmp.ne.s32.totalorder %s47, %s49
      %p53 = scmp.eq.s32.totalorder %s13, 0
      %p54 = por %p52, %p53
      %p55 = scmp.ne.s32.totalorder %s47, %s49
      %p56 = scmp.eq.s32.totalorder %s18, 1
      %p57 = por %p55, %p56
      %p58 = scmp.ne.s32.totalorder %s49, %s50
      %p59 = scmp.eq.s32.totalorder %s18, 0
      %p60 = por %p58, %p59
      %p61 = scmp.ne.s32.totalorder %s49, %s50
      %p62 = scmp.eq.s32.totalorder %s19, 1
      %p63 = por %p61, %p62
      %p65 = scmp.ne.s32.totalorder %s50, %s64
      %p66 = scmp.eq.s32.totalorder %s19, 0
      %p67 = por %p65, %p66
      %s69 = sadd.s32 %s68, 1
      %p72 = scmp.eq.s32.totalorder %s13, 1
      %p73 = scmp.ne.s32.totalorder %s68, %s70
      %p74 = scmp.eq.s32.totalorder %s13, 0
      %p75 = por %p73, %p74
      %p76 = scmp.ne.s32.totalorder %s68, %s70
      %p77 = scmp.eq.s32.totalorder %s18, 1
      %p78 = por %p76, %p77
      %p79 = scmp.ne.s32.totalorder %s70, %s71
      %p80 = scmp.eq.s32.totalorder %s18, 0
      %p81 = por %p79, %p80
      %p82 = scmp.ne.s32.totalorder %s70, %s71
      %p83 = scmp.eq.s32.totalorder %s19, 1
      %p84 = por %p82, %p83
      %p86 = scmp.ne.s32.totalorder %s71, %s85
      %p87 = scmp.eq.s32.totalorder %s19, 0
      %p88 = por %p86, %p87
      %s89 = ssub.s32 %s13, %s20
      %p90 = scmp.eq.s32.totalorder %s89, 0
      %s92 = sadd.s32 %s91, 1
      %s93 = scalar_select %p90, %s91, %s92
      %p96 = pneg %p90
      %p97 = scmp.eq.s32.totalorder %s13, 1
      %p98 = por %p96, %p97
      %p99 = scmp.ne.s32.totalorder %s91, %s94
      %p100 = scmp.eq.s32.totalorder %s13, 0
      %p101 = por %p99, %p100
      %p102 = scmp.ne.s32.totalorder %s91, %s94
      %p103 = scmp.eq.s32.totalorder %s18, 1
      %p104 = por %p102, %p103
      %p105 = scmp.ne.s32.totalorder %s94, %s95
      %p106 = scmp.eq.s32.totalorder %s18, 0
      %p107 = por %p105, %p106
      %p108 = scmp.ne.s32.totalorder %s94, %s95
      %p109 = scmp.eq.s32.totalorder %s19, 1
      %p110 = por %p108, %p109
      %p112 = scmp.ne.s32.totalorder %s95, %s111
      %p113 = scmp.eq.s32.totalorder %s19, 0
      %p114 = por %p112, %p113
      %p115 = scmp.le.s32.totalorder 1, %s13
      %p116 = scmp.lt.s32.totalorder %s13, 3
      %p117 = pnand %p115, %p116
      %p118 = pneg %p117
      // Predicated region
      $region9: #{tpu_custom_call.1} parent=5 // pred_check
        _
      $region10: #{tpu_custom_call.1} parent=5 // pred_check_branch
        %120 = sbr.rel (%p117) target = $region12
      $region11: #{tpu_custom_call.1} parent=5 // pred_region
        %s121 = ssub.s32 %s13, 1
        // Predicated region
        $region13: #{tpu_custom_call.1} parent=11 // pred_check
          %p122 = pneg %p60
        $region14: #{tpu_custom_call.1} parent=11 // pred_check_branch
          %124 = sbr.rel (%p122) target = $region16
        $region15: #{tpu_custom_call.1} parent=11 // pred_region
          %s126 = ssub.s32 512, 512
          %127 = vsyncadd [#allocation5], %s126
          %s128 = sshll.u32 [#allocation4], 4
          %s129 = int_to_ptr.vmem [resolvable:$true] %s128
          %134 = dma.hbm_to_vmem [thread:$0]  %s1, 512, %s129, [#allocation5], 128, 128, 8
        $region16: #{tpu_custom_call.1} parent=11 // pred_fallthru
          _
        // Predicated region
        $region17: #{tpu_custom_call.1} parent=11 // pred_check
          %p135 = pneg %p81
        $region18: #{tpu_custom_call.1} parent=11 // pred_check_branch
          %137 = sbr.rel (%p135) target = $region20
        $region19: #{tpu_custom_call.1} parent=11 // pred_region
          _
        $region20: #{tpu_custom_call.1} parent=11 // pred_fallthru
          _
      $region12: #{tpu_custom_call.1} parent=5 // pred_fallthru
        _
      %p138 = scmp.lt.s32.totalorder %s13, 2
      // Predicated region
      $region21: #{tpu_custom_call.1} parent=5 // pred_check
        %p139 = pneg %p138
      $region22: #{tpu_custom_call.1} parent=5 // pred_check_branch
        %141 = sbr.rel (%p139) target = $region24
      $region23: #{tpu_custom_call.1} parent=5 // pred_region
        // Predicated region
        $region25: #{tpu_custom_call.1} parent=23 // pred_check
          %p142 = pneg %p33
        $region26: #{tpu_custom_call.1} parent=23 // pred_check_branch
          %144 = sbr.rel (%p142) target = $region28
        $region27: #{tpu_custom_call.1} parent=23 // pred_region
          %s145 = sand.u32 %s23, 1
          %s146 = scalar_lea.sflag [#allocation3], %s145
          %s147 = sand.u32 %s23, 1
          %s148 = smul.addr %s147, 64
          %s149 = scalar_lea.vmem [#allocation2], %s148
          %s151 = ssub.s32 1024, 1024
          %152 = vsyncadd %s146, %s151
          %s153 = smul.addr %s13, 8
          %s154 = smul.addr %s153, 128
          %s155 = scalar_lea.hbm %s0, %s154
          %s156 = sshll.u32 %s149, 4
          %s157 = int_to_ptr.vmem [resolvable:$true] %s156
          %162 = dma.hbm_to_vmem [thread:$0]  %s155, 1024, %s157, %s146, 128, 128, 8
        $region28: #{tpu_custom_call.1} parent=23 // pred_fallthru
          _
      $region24: #{tpu_custom_call.1} parent=5 // pred_fallthru
        _
      %p163 = scmp.le.s32.totalorder 1, %s13
      %p164 = scmp.lt.s32.totalorder %s13, 3
      %p165 = pnand %p163, %p164
      %p166 = pneg %p165
      // Predicated region
      $region29: #{tpu_custom_call.1} parent=5 // pred_check
        _
      $region30: #{tpu_custom_call.1} parent=5 // pred_check_branch
        %168 = sbr.rel (%p165) target = $region32
      $region31: #{tpu_custom_call.1} parent=5 // pred_region
        %s169 = ssub.s32 %s13, 1
        %s170 = sand.u32 %s26, 1
        %s171 = scalar_lea.sflag [#allocation3], %s170
        %s172 = sand.u32 %s26, 1
        %s173 = smul.addr %s172, 64
        %s174 = scalar_lea.vmem [#allocation2], %s173
        // Predicated region
        $region33: #{tpu_custom_call.1} parent=31 // pred_check
          %p175 = pneg %p39
        $region34: #{tpu_custom_call.1} parent=31 // pred_check_branch
          %177 = sbr.rel (%p175) target = $region36
        $region35: #{tpu_custom_call.1} parent=31 // pred_region
          %178 = dma.done %s171, 1024
        $region36: #{tpu_custom_call.1} parent=31 // pred_fallthru
          _
        // Predicated region
        $region37: #{tpu_custom_call.1} parent=31 // pred_check
          %p179 = pneg %p60
        $region38: #{tpu_custom_call.1} parent=31 // pred_check_branch
          %181 = sbr.rel (%p179) target = $region40
        $region39: #{tpu_custom_call.1} parent=31 // pred_region
          %182 = dma.done [#allocation5], 512
        $region40: #{tpu_custom_call.1} parent=31 // pred_fallthru
          _
        %s183 = sand.u32 %s26, 1
        %s184 = scalar_lea.sflag [#allocation3], %s183
        %s185 = sand.u32 %s26, 1
        %s186 = smul.addr %s185, 64
        %s187 = scalar_lea.vmem [#allocation2], %s186
        %p188 = pneg %p39
        %p189 = pneg %p36
        %p190 = pneg %p60
        %p191 = pneg %p57
        %p192 = pneg %p81
        %p193 = pneg %p78
        %p194 = pneg %p107
        %p195 = pneg %p104
        %p196 = scmp.lt.s32.totalorder %s18, 1
        %s197 = scalar_select %p196, %s18, 1
        %s198 = smul.addr %s197, 8
        %s199 = scalar_lea.vmem %s3, %s198
        %p200 = scmp.lt.s32.totalorder %s18, 1
        %s201 = scalar_select %p200, %s18, 1
        %s202 = smul.addr %s201, 8
        %s203 = scalar_lea.vmem %s3, %s202
        %v204 = vld [vmem:[%s174] sm:$0xff]
        %v205 = vld [vmem:[%s174 + $0x8] sm:$0xff]
        %v206 = vld [vmem:[%s174 + $0x10] sm:$0xff]
        %v207 = vld [vmem:[%s174 + $0x18] sm:$0xff]
        %v208 = vld [vmem:[%s174 + $0x20] sm:$0xff]
        %v209 = vld [vmem:[%s174 + $0x28] sm:$0xff]
        %v210 = vld [vmem:[%s174 + $0x30] sm:$0xff]
        %v211 = vld [vmem:[%s174 + $0x38] sm:$0xff]
        %v212 = vld [vmem:[#allocation4] sm:$0xff]
        %v213 = vld [vmem:[#allocation4 + $0x8] sm:$0xff]
        %v214 = vld [vmem:[#allocation4 + $0x10] sm:$0xff]
        %v215 = vld [vmem:[#allocation4 + $0x18] sm:$0xff]
        %vm216 = vcmask 523264
        %v218 = vsel %vm216, %v212, 0
        %v221 = vsel %vm216, %v213, 0
        %v224 = vsel %vm216, %v214, 0
        %v227 = vsel %vm216, %v215, 0
        %229 = vmatprep.subr.mxu0 0.0
        %230 = vmatpush1.msra.mxu0 %v204
        %231 = vmatprep.subr.mxu0 0.0
        %232 = vmatpush1.msra.mxu0 %v205
        %233 = vmatprep.subr.mxu0 0.0
        %234 = vmatpush1.msra.mxu0 %v206
        %235 = vmatprep.subr.mxu0 0.0
        %236 = vmatpush1.msra.mxu0 %v207
        %237 = vmatprep.subr.mxu0 0.0
        %238 = vmatpush1.msra.mxu0 %v208
        %239 = vmatprep.subr.mxu0 0.0
        %240 = vmatpush1.msra.mxu0 %v209
        %241 = vmatprep.subr.mxu0 0.0
        %242 = vmatpush1.msra.mxu0 %v210
        %243 = vmatprep.subr.mxu0 0.0
        %244 = vmatpush1.msra.mxu0 %v211
        %245 = vmatprep.subr.mxu0 0.0
        %246 = vmatpush1.msra.mxu0 0.0
        %247 = vmatprep.subr.mxu0 0.0
        %248 = vmatpush1.msra.mxu0 0.0
        %249 = vmatprep.subr.mxu0 0.0
        %250 = vmatpush1.msra.mxu0 0.0
        %251 = vmatprep.subr.mxu0 0.0
        %252 = vmatpush1.msra.mxu0 0.0
        %253 = vmatprep.subr.mxu0 0.0
        %254 = vmatpush1.msra.mxu0 0.0
        %255 = vmatprep.subr.mxu0 0.0
        %256 = vmatpush1.msra.mxu0 0.0
        %257 = vmatprep.subr.mxu0 0.0
        %258 = vmatpush1.msra.mxu0 0.0
        %259 = vmatprep.subr.mxu0 0.0
        %260 = vmatpush1.msra.mxu0 0.0
        %261 = vmatprep.subr.mxu0 0.0
        %262 = vmatpush1.msra.mxu0 0.0
        %263 = vmatprep.subr.mxu0 0.0
        %264 = vmatpush1.msra.mxu0 0.0
        %265 = vmatprep.subr.mxu0 0.0
        %266 = vmatpush1.msra.mxu0 0.0
        %267 = vmatprep.subr.mxu0 0.0
        %268 = vmatpush1.msra.mxu0 0.0
        %269 = vmatprep.subr.mxu0 0.0
        %270 = vmatpush1.msra.mxu0 0.0
        %271 = vmatprep.subr.mxu0 0.0
        %272 = vmatpush1.msra.mxu0 0.0
        %273 = vmatprep.subr.mxu0 0.0
        %274 = vmatpush1.msra.mxu0 0.0
        %275 = vmatprep.subr.mxu0 0.0
        %276 = vmatpush1.msra.mxu0 0.0
        %277 = vmatprep.subr.mxu0 0.0
        %278 = vmatpush1.msra.mxu0 0.0
        %279 = vmatprep.subr.mxu0 0.0
        %280 = vmatpush1.msra.mxu0 0.0
        %281 = vmatprep.subr.mxu0 0.0
        %282 = vmatpush1.msra.mxu0 0.0
        %283 = vmatprep.subr.mxu0 0.0
        %284 = vmatpush1.msra.mxu0 0.0
        %285 = vmatprep.subr.mxu0 0.0
        %286 = vmatpush1.msra.mxu0 0.0
        %287 = vmatprep.subr.mxu0 0.0
        %288 = vmatpush1.msra.mxu0 0.0
        %289 = vmatprep.subr.mxu0 0.0
        %290 = vmatpush1.msra.mxu0 0.0
        %291 = vmatprep.subr.mxu0 0.0
        %292 = vmatpush1.msra.mxu0 0.0
        %293 = vmatprep.mubr.f32.mxu0 0.0
        %294 = vmatmul.mubr.f32.gmra.mrb[0].mxu0 %v218
        %v295 = vpop.f32.mrb[0].mxu0
        %v296 = vadd.f32 0.0, %v295
        %v297 = vpop.f32.mrb[0].mxu0
        %298 = vmatprep.mubr.f32.mxu0 0.0
        %299 = vmatmul.mubr.f32.gmra.mrb[0].mxu0 %v221
        %v300 = vpop.f32.mrb[0].mxu0
        %v301 = vadd.f32 0.0, %v300
        %v302 = vpop.f32.mrb[0].mxu0
        %303 = vmatprep.mubr.f32.mxu0 0.0
        %304 = vmatmul.mubr.f32.gmra.mrb[0].mxu0 %v224
        %v305 = vpop.f32.mrb[0].mxu0
        %v306 = vadd.f32 0.0, %v305
        %v307 = vpop.f32.mrb[0].mxu0
        %308 = vmatprep.mubr.f32.mxu0 0.0
        %309 = vmatmul.mubr.f32.gmra.mrb[0].mxu0 %v227
        %v310 = vpop.f32.mrb[0].mxu0
        %v311 = vadd.f32 0.0, %v310
        %v312 = vpop.f32.mrb[0].mxu0
        %313 = vdwg.mxu0
        %v314 = vld [vmem:[%s2] sm:$0x3f]
        %v316 = vrot.slane %v296, 2
        %317 = vrot.lane.b32.xlu0 %v316, 127
        %v318 = vpop.permute.xlu0 %317
        %v320 = vadd.f32 %v296, %v318
        %v321 = vrot.slane %v296, 4
        %322 = vrot.lane.b32.xlu0 %v321, 126
        %v323 = vpop.permute.xlu0 %322
        %v325 = vadd.f32 %v320, %v323
        %327 = vset.pattern.permute.xlu0 0
        %328 = vperm.xlu0 %327, %v314
        %v329 = vpop.permute.xlu0 %328
        %v330 = vrot.slane %v329, 4
        %v332 = vadd.f32 %v325, %v330
        %334 = vrot.lane.b32.xlu0 %v332, 126
        %v335 = vpop.permute.xlu0 %334
        %vm337 = vcmask 123904
        %338 = vst.msk [vmem:[%s203 + $0x4] sm:$0x3] %vm337, %v335
        %v339 = vrot.slane %v296, 1
        %340 = vrot.lane.b32.xlu0 %v339, 127
        %v341 = vpop.permute.xlu0 %340
        %v343 = vadd.f32 %v296, %v341
        %v345 = vrot.slane %v301, 2
        %346 = vrot.lane.b32.xlu0 %v345, 126
        %v347 = vpop.permute.xlu0 %346
        %v349 = vadd.f32 %v343, %v347
        %v350 = vrot.slane %v301, 3
        %351 = vrot.lane.b32.xlu0 %v350, 125
        %v352 = vpop.permute.xlu0 %351
        %v354 = vadd.f32 %v349, %v352
        %v355 = vrot.slane %v301, 4
        %356 = vrot.lane.b32.xlu0 %v355, 124
        %v357 = vpop.permute.xlu0 %356
        %v359 = vadd.f32 %v354, %v357
        %v360 = vrot.slane %v329, 5
        %v362 = vadd.f32 %v359, %v360
        %364 = vrot.lane.b32.xlu0 %v362, 127
        %v365 = vpop.permute.xlu0 %364
        %vm367 = vcmask 129030
        %368 = vst.msk [vmem:[%s203 - $0x3] sm:$0x40] %vm367, %v365
        %vm370 = vcmask 1044480
        %v371 = vrot.slane %v306, 3
        %v372 = vsel %vm370, %v350, %v371
        %373 = vrot.lane.b32.xlu0 %v372, 127
        %v374 = vpop.permute.xlu0 %373
        %v376 = vadd.f32 %v301, %v374
        %v377 = vrot.slane %v306, 6
        %378 = vrot.lane.b32.xlu0 %v377, 126
        %v379 = vpop.permute.xlu0 %378
        %v381 = vadd.f32 %v376, %v379
        %v382 = vrot.slane %v306, 1
        %383 = vrot.lane.b32.xlu0 %v382, 125
        %v384 = vpop.permute.xlu0 %383
        %v386 = vadd.f32 %v381, %v384
        %vm388 = vcmask 1043456
        %v389 = vrot.slane %v306, 4
        %v390 = vrot.slane %v311, 4
        %v391 = vsel %vm388, %v389, %v390
        %392 = vrot.lane.b32.xlu0 %v391, 124
        %v393 = vpop.permute.xlu0 %392
        %v395 = vadd.f32 %v386, %v393
        %v396 = vrot.slane %v311, 7
        %397 = vrot.lane.b32.xlu0 %v396, 123
        %v398 = vpop.permute.xlu0 %397
        %v400 = vadd.f32 %v395, %v398
        %v401 = vrot.slane %v311, 2
        %402 = vrot.lane.b32.xlu0 %v401, 122
        %v403 = vpop.permute.xlu0 %402
        %v405 = vadd.f32 %v400, %v403
        %v406 = vadd.f32 %v405, %v360
        %vm407 = vcmask 128003
        %408 = vst.msk [vmem:[%s203 - $0x3] sm:$0x38] %vm407, %v406
        %p409 = scmp.lt.s32.totalorder %s18, 1
        %s410 = scalar_select %p409, %s18, 1
        %s411 = smul.addr %s410, 8
        %s412 = scalar_lea.vmem %s3, %s411
        // Predicated region
        $region41: #{tpu_custom_call.1} parent=31 // pred_check
          %p413 = pneg %p104
        $region42: #{tpu_custom_call.1} parent=31 // pred_check_branch
          %415 = sbr.rel (%p413) target = $region44
        $region43: #{tpu_custom_call.1} parent=31 // pred_region
          _
        $region44: #{tpu_custom_call.1} parent=31 // pred_fallthru
          _
      $region32: #{tpu_custom_call.1} parent=5 // pred_fallthru
        _
      %p416 = scmp.le.s32.totalorder 2, %s13
      // Predicated region
      $region45: #{tpu_custom_call.1} parent=5 // pred_check
        %p417 = pneg %p416
      $region46: #{tpu_custom_call.1} parent=5 // pred_check_branch
        %419 = sbr.rel (%p417) target = $region48
      $region47: #{tpu_custom_call.1} parent=5 // pred_region
        %s420 = ssub.s32 %s13, 2
        // Predicated region
        $region49: #{tpu_custom_call.1} parent=47 // pred_check
          %p421 = pneg %p110
        $region50: #{tpu_custom_call.1} parent=47 // pred_check_branch
          %423 = sbr.rel (%p421) target = $region52
        $region51: #{tpu_custom_call.1} parent=47 // pred_region
          %p424 = scmp.lt.s32.totalorder %s19, 1
          %s425 = scalar_select %p424, %s19, 1
          %s426 = smul.addr %s425, 8
          %s427 = scalar_lea.vmem %s3, %s426
        $region52: #{tpu_custom_call.1} parent=47 // pred_fallthru
          _
      $region48: #{tpu_custom_call.1} parent=5 // pred_fallthru
        _
    $region6: #{tpu_custom_call.1} parent=1 // loop_footer
      %s17 = sadd.s32 1, %s13
    $region7: #{tpu_custom_call.1} parent=1 // loop_footer_branch
      %12 = sbr.rel target = $region3
    $region8: #{tpu_custom_call.1} parent=1 // loop_exit
      _
    %428 = vsyncpa [#allocation3], 1
    %s429 = scalar_lea.sflag [#allocation3], 1
    %430 = vsyncpa %s429, 1
    %431 = vsyncpa [#allocation5], 1

</llo_original>
